<compile_context>
chip_gen: v6e
topology: v6e:2x2x1
jax: 0.10.0
libtpu: 0.0.40
codegen_flags: <defaults>
</compile_context>

<pallas_src>
import math

import jax
import jax.numpy as jnp
from jax.experimental import pallas as pl
from jax.experimental.pallas import tpu as pltpu


def _round_up(x, m):
    return ((x + m - 1) // m) * m


def _temporal_decay_kernel(d_ref, wt_ref, b_ref, o_ref):
    # d_ref: (rows_tile, pack*D_in)   wt_ref: (pack*D_in, pack*H)
    # b_ref: (1, pack*H)              o_ref: (rows_tile, pack*H)
    x = jax.lax.dot_general(
        d_ref[...], wt_ref[...],
        dimension_numbers=(((1,), (0,)), ((), ())),   # standard contraction
        preferred_element_type=jnp.float32,           # f32 accumulation on MXU
    )
    x = x + b_ref[...]                                # bias broadcast over rows
    # relu -> VPU, exp -> EUP: different VLIW slots than the MXU feed.
    o_ref[...] = jnp.exp(-jnp.maximum(x, 0.0)).astype(o_ref.dtype)


def pack_decay_params(W, b, pack):
    """Build the lane-dense packed parameters once (hoistable to load time)."""
    W = jnp.asarray(W, jnp.float32)
    b = jnp.asarray(b, jnp.float32)
    H, _ = W.shape
    # Block-diagonal stack of `pack` copies of W^T -> (pack*D_in, pack*H).
    wt_bd = jnp.kron(jnp.eye(pack, dtype=jnp.float32), W.T)
    b_tiled = jnp.tile(b, pack).reshape(1, pack * H)
    return wt_bd, b_tiled


def temporal_decay(d, W, b, *, block_rows=2048, pack=None, gridless_rows=1024,
                   packed_params=None):
    """BRITS TemporalDecay forward.

    d: (..., input_size)   W: (rnn_hid_size, input_size)   b: (rnn_hid_size,)
    returns gamma = exp(-relu(d @ W.T + b)): (..., rnn_hid_size) in float32.
    """
    H, D_in = W.shape
    assert d.shape[-1] == D_in
    if pack is None:
        # 4 for the canonical H=D_in=32 case -> 128-lane super-rows.
        pack = max(1, 128 // max(H, D_in))
    assert block_rows % (8 * pack) == 0, "row tile must pack to a multiple of 8 sublanes"

    lead = d.shape[:-1]
    rows = int(math.prod(lead)) if lead else 1

    d2 = jnp.asarray(d, jnp.float32).reshape(rows, D_in)
    tail = (-rows) % pack
    if tail:
        # Tiny tail pad only when rows % pack != 0 (common shapes avoid this).
        d2 = jnp.pad(d2, ((0, tail), (0, 0)))
    rows_p = rows + tail
    rows_super = rows_p // pack
    d2 = d2.reshape(rows_super, pack * D_in)          # free contiguous reshape

    if packed_params is None:
        packed_params = pack_decay_params(W, b, pack)
    wt_bd, b_tiled = packed_params

    if rows <= gridless_rows:
        # Gridless single-block call: no pipeline machinery, operands whole in VMEM.
        gamma = pl.pallas_call(
            _temporal_decay_kernel,
            out_shape=jax.ShapeDtypeStruct((rows_super, pack * H), jnp.float32),
            in_specs=[
                pl.BlockSpec(memory_space=pltpu.MemorySpace.VMEM),
                pl.BlockSpec(memory_space=pltpu.MemorySpace.VMEM),
                pl.BlockSpec(memory_space=pltpu.MemorySpace.VMEM),
            ],
            out_specs=pl.BlockSpec(memory_space=pltpu.MemorySpace.VMEM),
        )(d2, wt_bd, b_tiled)
    else:
        # Row-tiled grid; W / b held VMEM-resident via constant index_maps.
        # Shrink the tile only as needed to guarantee >= 2 blocks (v7x 2-TC sharding).
        block_super = min(block_rows // pack, _round_up(pl.cdiv(rows_super, 2), 8))
        n_blocks = pl.cdiv(rows_super, block_super)   # ragged last block is masked
        gamma = pl.pallas_call(
            _temporal_decay_kernel,
            out_shape=jax.ShapeDtypeStruct((rows_super, pack * H), jnp.float32),
            grid=(n_blocks,),
            in_specs=[
                pl.BlockSpec((block_super, pack * D_in), lambda i: (i, 0)),
                pl.BlockSpec((pack * D_in, pack * H), lambda i: (0, 0)),
                pl.BlockSpec((1, pack * H), lambda i: (0, 0)),
            ],
            out_specs=pl.BlockSpec((block_super, pack * H), lambda i: (i, 0)),
            compiler_params=pltpu.CompilerParams(
                dimension_semantics=("parallel",)),
        )(d2, wt_bd, b_tiled)

    gamma = gamma.reshape(rows_p, H)                  # free contiguous reshape
    if tail:
        gamma = gamma[:rows]
    return gamma.reshape(*lead, H) if lead else gamma.reshape(H)


if __name__ == "__main__":
    # BRITS applies TemporalDecay at every timestep; flatten (seq, batch) rows
    # into one batched launch.
    seq_len, batch, input_size, rnn_hid_size = 16, 24, 32, 32

    key = jax.random.PRNGKey(0)
    k_d, k_w, k_b = jax.random.split(key, 3)

    # reset_parameters(): stdv = 1/sqrt(rnn_hid_size); W, b ~ U(-stdv, stdv)
    stdv = 1.0 / math.sqrt(rnn_hid_size)
    W = jax.random.uniform(k_w, (rnn_hid_size, input_size),
                           minval=-stdv, maxval=stdv, dtype=jnp.float32)
    b = jax.random.uniform(k_b, (rnn_hid_size,),
                           minval=-stdv, maxval=stdv, dtype=jnp.float32)

    # Time-delta features (non-negative), shaped (seq, batch, input_size).
    d = jax.random.uniform(k_d, (seq_len, batch, input_size),
                           minval=0.0, maxval=5.0, dtype=jnp.float32)

    # Plain-JAX reference (same math as the original module).
    ref = jnp.exp(-jnp.maximum(d.reshape(-1, input_size) @ W.T + b, 0.0))
    ref = ref.reshape(seq_len, batch, rnn_hid_size)

    # 1) Small input -> gridless lane-dense single block (rows=384 <= 1024).
    g_small = jax.block_until_ready(temporal_decay(d, W, b))
    assert g_small.shape == (seq_len, batch, rnn_hid_size)
    assert jnp.allclose(g_small, ref, atol=1e-5, rtol=1e-5)

    # 2) Force the tiled grid path: 96 super-rows in 40-super-row tiles ->
    #    3 blocks, ragged (masked) last block, no pad/slice HBM passes.
    g_grid = jax.block_until_ready(
        temporal_decay(d, W, b, block_rows=160, gridless_rows=0))
    assert jnp.allclose(g_grid, ref, atol=1e-5, rtol=1e-5)

    # 3) Rows not divisible by the packing factor (tail-pad path): 371 rows.
    d_odd = d.reshape(-1, input_size)[:371].reshape(7, 53, input_size)
    ref_odd = jnp.exp(-jnp.maximum(
        d_odd.reshape(-1, input_size) @ W.T + b, 0.0)).reshape(7, 53, rnn_hid_size)
    g_odd = jax.block_until_ready(temporal_decay(d_odd, W, b))
    assert g_odd.shape == (7, 53, rnn_hid_size)
    assert jnp.allclose(g_odd, ref_odd, atol=1e-5, rtol=1e-5)

    print("KERNEL_OK")
</pallas_src>

<mosaic_0001>
module attributes {stable_mosaic.version = 11 : i64} {
  func.func @_temporal_decay_kernel(%arg0: memref<96x128xf32, #tpu.memory_space<vmem>>, %arg1: memref<128x128xf32, #tpu.memory_space<vmem>>, %arg2: memref<1x128xf32, #tpu.memory_space<vmem>>, %arg3: memref<96x128xf32, #tpu.memory_space<vmem>>) attributes {dimension_semantics = [], scalar_prefetch = 0 : i64, scratch_operands = 0 : i64, tpu.core_type = #tpu.core_type<tc>} {
    %c0 = arith.constant 0 : index
    %c0_0 = arith.constant 0 : index
    %0 = vector.load %arg0[%c0, %c0_0] : memref<96x128xf32, #tpu.memory_space<vmem>>, vector<96x128xf32>
    %c0_1 = arith.constant 0 : index
    %c0_2 = arith.constant 0 : index
    %1 = vector.load %arg1[%c0_1, %c0_2] : memref<128x128xf32, #tpu.memory_space<vmem>>, vector<128x128xf32>
    %cst = arith.constant dense<0.000000e+00> : vector<96x128xf32>
    %2 = tpu.matmul %0, %1, %cst {dimension_numbers = #tpu.dot_dimension_numbers<[1], [0], [0], [1], [0, 0, 1, 1], [], []>} : vector<96x128xf32>, vector<128x128xf32>, vector<96x128xf32> -> vector<96x128xf32>
    %c0_3 = arith.constant 0 : index
    %c0_4 = arith.constant 0 : index
    %3 = vector.load %arg2[%c0_3, %c0_4] : memref<1x128xf32, #tpu.memory_space<vmem>>, vector<1x128xf32>
    %4 = vector.broadcast %3 : vector<1x128xf32> to vector<96x128xf32>
    %5 = arith.addf %2, %4 : vector<96x128xf32>
    %cst_5 = arith.constant 0.000000e+00 : f32
    %6 = vector.broadcast %cst_5 : f32 to vector<96x128xf32>
    %7 = arith.maximumf %5, %6 : vector<96x128xf32>
    %cst_6 = arith.constant 0.000000e+00 : f32
    %8 = vector.broadcast %cst_6 : f32 to vector<96x128xf32>
    %9 = arith.subf %8, %7 : vector<96x128xf32>
    %10 = math.exp %9 : vector<96x128xf32>
    %c0_7 = arith.constant 0 : index
    %c0_8 = arith.constant 0 : index
    %11 = vector.load %arg3[%c0_7, %c0_8] : memref<96x128xf32, #tpu.memory_space<vmem>>, vector<96x128xf32>
    tpu.vector_store %arg3[%c0_7, %c0_8], %10 {strides = array<i32>} : memref<96x128xf32, #tpu.memory_space<vmem>>, vector<96x128xf32>,
    return
  }
}

</mosaic_0001>

<llo_original>
// kernel: tpu_custom_call.1
$region0: #{tpu_custom_call.1}
  #allocation0 [shape = 'u32[]', space=smem, size = 0x4, offset = 0x4, fixed_abs, tag = 'smem constant byte address 0x4 - core index']
  #allocation1 [shape = 'u32[144,128]{1,0:T(1,128)}', space=vmem, size = 0x12000, scoped, tag = 'internal scratch']
  %s0 = inlined_call_operand.hbm [shape: f32[96,128], index: 0, kind: input, shape index: {}]
  %s1 = inlined_call_operand.hbm [shape: f32[128,128], index: 1, kind: input, shape index: {}]
  %s2 = inlined_call_operand.vmem [shape: f32[1,128], index: 2, kind: input, shape index: {}]
  %s3 = inlined_call_operand.hbm [shape: f32[96,128], index: 3, kind: output, shape index: {}]
  %s4 = sld [smem:[#allocation0]]
  $region30: #{tpu_custom_call.1} parent=0
    _
  %s6 = ssub.s32 1, %s4
  %s7 = scalar_select 0, %s6, %s4
  $region1: #{tpu_custom_call.1} parent=0
    #allocation2 [shape = 'u8[49152]{0}', space=vmem, size = 0xc000, scoped, tag = 'input window, operand 0, single buffered']
    #allocation3 [shape = 's32[1]{0}', space=sflag, size = 0x4, scoped, tag = 'scoped memory for tpu_custom_call.1']
    #allocation4 [shape = 's32[1]{0}', space=sflag, size = 0x4, scoped, tag = 'scoped memory for tpu_custom_call.1']
    #allocation5 [shape = 'u8[65536]{0}', space=vmem, size = 0x10000, scoped, tag = 'input window, operand 1, single buffered']
    #allocation6 [shape = 's32[1]{0}', space=sflag, size = 0x4, scoped, tag = 'scoped memory for tpu_custom_call.1']
    #allocation7 [shape = 'u8[49152]{0}', space=vmem, size = 0xc000, scoped, tag = 'output window, operand 0, single buffered']
    %8 = vsyncpa [#allocation3], 0
    %9 = vsyncpa [#allocation6], 0
    %10 = vsyncpa [#allocation4], 0
    // Predicated region
    $region2: #{tpu_custom_call.1} parent=1 // pred_check
      _
    $region3: #{tpu_custom_call.1} parent=1 // pred_check_branch
      %12 = sbr.rel (0) target = $region5
    $region4: #{tpu_custom_call.1} parent=1 // pred_region
      %s14 = ssub.s32 1536, 1536
      %15 = vsyncadd [#allocation3], %s14
      %s16 = sshll.u32 [#allocation2], 4
      %s17 = int_to_ptr.vmem [resolvable:$true] %s16
      %22 = dma.hbm_to_vmem [thread:$0]  %s0, 1536, %s17, [#allocation3], 128, 128, 8
    $region5: #{tpu_custom_call.1} parent=1 // pred_fallthru
      _
    // Predicated region
    $region6: #{tpu_custom_call.1} parent=1 // pred_check
      _
    $region7: #{tpu_custom_call.1} parent=1 // pred_check_branch
      %24 = sbr.rel (0) target = $region9
    $region8: #{tpu_custom_call.1} parent=1 // pred_region
      %s26 = ssub.s32 2048, 2048
      %27 = vsyncadd [#allocation6], %s26
      %s28 = sshll.u32 [#allocation5], 4
      %s29 = int_to_ptr.vmem [resolvable:$true] %s28
      %34 = dma.hbm_to_vmem [thread:$0]  %s1, 2048, %s29, [#allocation6], 128, 128, 8
    $region9: #{tpu_custom_call.1} parent=1 // pred_fallthru
      _
    // Predicated region
    $region10: #{tpu_custom_call.1} parent=1 // pred_check
      _
    $region11: #{tpu_custom_call.1} parent=1 // pred_check_branch
      %36 = sbr.rel (0) target = $region13
    $region12: #{tpu_custom_call.1} parent=1 // pred_region
      _
    $region13: #{tpu_custom_call.1} parent=1 // pred_fallthru
      _
    // Predicated region
    $region14: #{tpu_custom_call.1} parent=1 // pred_check
      _
    $region15: #{tpu_custom_call.1} parent=1 // pred_check_branch
      %38 = sbr.rel (0) target = $region17
    $region16: #{tpu_custom_call.1} parent=1 // pred_region
      %39 = dma.done [#allocation3], 1536
    $region17: #{tpu_custom_call.1} parent=1 // pred_fallthru
      _
    // Predicated region
    $region18: #{tpu_custom_call.1} parent=1 // pred_check
      _
    $region19: #{tpu_custom_call.1} parent=1 // pred_check_branch
      %41 = sbr.rel (0) target = $region21
    $region20: #{tpu_custom_call.1} parent=1 // pred_region
      %42 = dma.done [#allocation6], 2048
    $region21: #{tpu_custom_call.1} parent=1 // pred_fallthru
      _
    %v43 = vld [vmem:[#allocation2] sm:$0xff]
    %v44 = vld [vmem:[#allocation2 + $0x8] sm:$0xff]
    %v45 = vld [vmem:[#allocation2 + $0x10] sm:$0xff]
    %v46 = vld [vmem:[#allocation2 + $0x18] sm:$0xff]
    %v47 = vld [vmem:[#allocation2 + $0x20] sm:$0xff]
    %v48 = vld [vmem:[#allocation2 + $0x28] sm:$0xff]
    %v49 = vld [vmem:[#allocation2 + $0x30] sm:$0xff]
    %v50 = vld [vmem:[#allocation2 + $0x38] sm:$0xff]
    %v51 = vld [vmem:[#allocation2 + $0x40] sm:$0xff]
    %v52 = vld [vmem:[#allocation2 + $0x48] sm:$0xff]
    %v53 = vld [vmem:[#allocation2 + $0x50] sm:$0xff]
    %v54 = vld [vmem:[#allocation2 + $0x58] sm:$0xff]
    %v55 = vld [vmem:[#allocation5] sm:$0xff]
    %v56 = vld [vmem:[#allocation5 + $0x8] sm:$0xff]
    %v57 = vld [vmem:[#allocation5 + $0x10] sm:$0xff]
    %v58 = vld [vmem:[#allocation5 + $0x18] sm:$0xff]
    %v59 = vld [vmem:[#allocation5 + $0x20] sm:$0xff]
    %v60 = vld [vmem:[#allocation5 + $0x28] sm:$0xff]
    %v61 = vld [vmem:[#allocation5 + $0x30] sm:$0xff]
    %v62 = vld [vmem:[#allocation5 + $0x38] sm:$0xff]
    %v63 = vld [vmem:[#allocation5 + $0x40] sm:$0xff]
    %v64 = vld [vmem:[#allocation5 + $0x48] sm:$0xff]
    %v65 = vld [vmem:[#allocation5 + $0x50] sm:$0xff]
    %v66 = vld [vmem:[#allocation5 + $0x58] sm:$0xff]
    %v67 = vld [vmem:[#allocation5 + $0x60] sm:$0xff]
    %v68 = vld [vmem:[#allocation5 + $0x68] sm:$0xff]
    %v69 = vld [vmem:[#allocation5 + $0x70] sm:$0xff]
    %v70 = vld [vmem:[#allocation5 + $0x78] sm:$0xff]
    %v71 = vld [vmem:[%s2] sm:$0x1]
    %v73 = vlaneseq
    %v74 = vshrl.u32 %v73, 7
    %v75 = vsub.s32 0, %v74
    %v76 = vrot.slane %v71, %v75
    %78 = vmatprep.subr.mxu0 0.0
    %79 = vmatpush1.msra.mxu0 %v70
    %80 = vmatprep.subr.mxu0 0.0
    %81 = vmatpush1.msra.mxu0 %v69
    %82 = vmatprep.subr.mxu0 0.0
    %83 = vmatpush1.msra.mxu0 %v68
    %84 = vmatprep.subr.mxu0 0.0
    %85 = vmatpush1.msra.mxu0 %v67
    %86 = vmatprep.subr.mxu0 0.0
    %87 = vmatpush1.msra.mxu0 %v66
    %88 = vmatprep.subr.mxu0 0.0
    %89 = vmatpush1.msra.mxu0 %v65
    %90 = vmatprep.subr.mxu0 0.0
    %91 = vmatpush1.msra.mxu0 %v64
    %92 = vmatprep.subr.mxu0 0.0
    %93 = vmatpush1.msra.mxu0 %v63
    %94 = vmatprep.subr.mxu0 0.0
    %95 = vmatpush1.msra.mxu0 %v62
    %96 = vmatprep.subr.mxu0 0.0
    %97 = vmatpush1.msra.mxu0 %v61
    %98 = vmatprep.subr.mxu0 0.0
    %99 = vmatpush1.msra.mxu0 %v60
    %100 = vmatprep.subr.mxu0 0.0
    %101 = vmatpush1.msra.mxu0 %v59
    %102 = vmatprep.subr.mxu0 0.0
    %103 = vmatpush1.msra.mxu0 %v58
    %104 = vmatprep.subr.mxu0 0.0
    %105 = vmatpush1.msra.mxu0 %v57
    %106 = vmatprep.subr.mxu0 0.0
    %107 = vmatpush1.msra.mxu0 %v56
    %108 = vmatprep.subr.mxu0 0.0
    %109 = vmatpush1.msra.mxu0 %v55
    %110 = vmatprep.subr.mxu0 0.0
    %111 = vmatpush2.msra.mxu0 0.0
    %112 = vmatprep.subr.mxu0 0.0
    %113 = vmatpush2.msra.mxu0 0.0
    %114 = vmatprep.subr.mxu0 0.0
    %115 = vmatpush2.msra.mxu0 0.0
    %116 = vmatprep.subr.mxu0 0.0
    %117 = vmatpush2.msra.mxu0 0.0
    %118 = vmatprep.subr.mxu0 0.0
    %119 = vmatpush2.msra.mxu0 0.0
    %120 = vmatprep.subr.mxu0 0.0
    %121 = vmatpush2.msra.mxu0 0.0
    %122 = vmatprep.subr.mxu0 0.0
    %123 = vmatpush2.msra.mxu0 0.0
    %124 = vmatprep.subr.mxu0 0.0
    %125 = vmatpush2.msra.mxu0 0.0
    %126 = vmatprep.subr.mxu0 0.0
    %127 = vmatpush2.msra.mxu0 0.0
    %128 = vmatprep.subr.mxu0 0.0
    %129 = vmatpush2.msra.mxu0 0.0
    %130 = vmatprep.subr.mxu0 0.0
    %131 = vmatpush2.msra.mxu0 0.0
    %132 = vmatprep.subr.mxu0 0.0
    %133 = vmatpush2.msra.mxu0 0.0
    %134 = vmatprep.subr.mxu0 0.0
    %135 = vmatpush2.msra.mxu0 0.0
    %136 = vmatprep.subr.mxu0 0.0
    %137 = vmatpush2.msra.mxu0 0.0
    %138 = vmatprep.subr.mxu0 0.0
    %139 = vmatpush2.msra.mxu0 0.0
    %140 = vmatprep.subr.mxu0 0.0
    %141 = vmatpush2.msra.mxu0 0.0
    %142 = vmatprep.mubr.f32.mxu0 0.0
    %143 = vmatmul.mubr.f32.gmra.mxu0 %v43
    %v144 = vpop.f32.mrf.mxu0
    %v145 = vadd.f32 %v76, %v144
    %v146 = vpop.f32.mrf.mxu0
    %147 = vmatprep.mubr.f32.mxu0 0.0
    %148 = vmatmul.mubr.f32.gmra.mxu0 %v44
    %v149 = vpop.f32.mrf.mxu0
    %v150 = vadd.f32 %v76, %v149
    %v151 = vpop.f32.mrf.mxu0
    %152 = vmatprep.mubr.f32.mxu0 0.0
    %153 = vmatmul.mubr.f32.gmra.mxu0 %v45
    %v154 = vpop.f32.mrf.mxu0
    %v155 = vadd.f32 %v76, %v154
    %v156 = vpop.f32.mrf.mxu0
    %157 = vmatprep.mubr.f32.mxu0 0.0
    %158 = vmatmul.mubr.f32.gmra.mxu0 %v46
    %v159 = vpop.f32.mrf.mxu0
    %v160 = vadd.f32 %v76, %v159
    %v161 = vpop.f32.mrf.mxu0
    %162 = vmatprep.mubr.f32.mxu0 0.0
    %163 = vmatmul.mubr.f32.gmra.mxu0 %v47
    %v164 = vpop.f32.mrf.mxu0
    %v165 = vadd.f32 %v76, %v164
    %v166 = vpop.f32.mrf.mxu0
    %167 = vmatprep.mubr.f32.mxu0 0.0
    %168 = vmatmul.mubr.f32.gmra.mxu0 %v48
    %v169 = vpop.f32.mrf.mxu0
    %v170 = vadd.f32 %v76, %v169
    %v171 = vpop.f32.mrf.mxu0
    %172 = vmatprep.mubr.f32.mxu0 0.0
    %173 = vmatmul.mubr.f32.gmra.mxu0 %v49
    %v174 = vpop.f32.mrf.mxu0
    %v175 = vadd.f32 %v76, %v174
    %v176 = vpop.f32.mrf.mxu0
    %177 = vmatprep.mubr.f32.mxu0 0.0
    %178 = vmatmul.mubr.f32.gmra.mxu0 %v50
    %v179 = vpop.f32.mrf.mxu0
    %v180 = vadd.f32 %v76, %v179
    %v181 = vpop.f32.mrf.mxu0
    %182 = vmatprep.mubr.f32.mxu0 0.0
    %183 = vmatmul.mubr.f32.gmra.mxu0 %v51
    %v184 = vpop.f32.mrf.mxu0
    %v185 = vadd.f32 %v76, %v184
    %v186 = vpop.f32.mrf.mxu0
    %187 = vmatprep.mubr.f32.mxu0 0.0
    %188 = vmatmul.mubr.f32.gmra.mxu0 %v52
    %v189 = vpop.f32.mrf.mxu0
    %v190 = vadd.f32 %v76, %v189
    %v191 = vpop.f32.mrf.mxu0
    %192 = vmatprep.mubr.f32.mxu0 0.0
    %193 = vmatmul.mubr.f32.gmra.mxu0 %v53
    %v194 = vpop.f32.mrf.mxu0
    %v195 = vadd.f32 %v76, %v194
    %v196 = vpop.f32.mrf.mxu0
    %197 = vmatprep.mubr.f32.mxu0 0.0
    %198 = vmatmul.mubr.f32.gmra.mxu0 %v54
    %v199 = vpop.f32.mrf.mxu0
    %v200 = vadd.f32 %v76, %v199
    %v201 = vpop.f32.mrf.mxu0
    %202 = vdwg.mxu0
    %v203 = vmax.f32 %v145, 0.0
    %v204 = vmax.f32 %v150, 0.0
    %v205 = vmax.f32 %v155, 0.0
    %v206 = vmax.f32 %v160, 0.0
    %v207 = vmax.f32 %v165, 0.0
    %v208 = vmax.f32 %v170, 0.0
    %v209 = vmax.f32 %v175, 0.0
    %v210 = vmax.f32 %v180, 0.0
    %v211 = vmax.f32 %v185, 0.0
    %v212 = vmax.f32 %v190, 0.0
    %v213 = vmax.f32 %v195, 0.0
    %v214 = vmax.f32 %v200, 0.0
    %v215 = vsub.f32 0.0, %v203
    %v216 = vsub.f32 0.0, %v204
    %v217 = vsub.f32 0.0, %v205
    %v218 = vsub.f32 0.0, %v206
    %v219 = vsub.f32 0.0, %v207
    %v220 = vsub.f32 0.0, %v208
    %v221 = vsub.f32 0.0, %v209
    %v222 = vsub.f32 0.0, %v210
    %v223 = vsub.f32 0.0, %v211
    %v224 = vsub.f32 0.0, %v212
    %v225 = vsub.f32 0.0, %v213
    %v226 = vsub.f32 0.0, %v214
    %v227 = vmul.f32 %v215, 1.442695
    %v228 = vpow.pop %v227
    %v229 = vmul.f32 %v216, 1.442695
    %v230 = vpow.pop %v229
    %v231 = vmul.f32 %v217, 1.442695
    %v232 = vpow.pop %v231
    %v233 = vmul.f32 %v218, 1.442695
    %v234 = vpow.pop %v233
    %v235 = vmul.f32 %v219, 1.442695
    %v236 = vpow.pop %v235
    %v237 = vmul.f32 %v220, 1.442695
    %v238 = vpow.pop %v237
    %v239 = vmul.f32 %v221, 1.442695
    %v240 = vpow.pop %v239
    %v241 = vmul.f32 %v222, 1.442695
    %v242 = vpow.pop %v241
    %v243 = vmul.f32 %v223, 1.442695
    %v244 = vpow.pop %v243
    %v245 = vmul.f32 %v224, 1.442695
    %v246 = vpow.pop %v245
    %v247 = vmul.f32 %v225, 1.442695
    %v248 = vpow.pop %v247
    %v249 = vmul.f32 %v226, 1.442695
    %v250 = vpow.pop %v249
    %251 = vst [vmem:[#allocation7] sm:$0xff] %v228
    %252 = vst [vmem:[#allocation7 + $0x8] sm:$0xff] %v230
    %253 = vst [vmem:[#allocation7 + $0x10] sm:$0xff] %v232
    %254 = vst [vmem:[#allocation7 + $0x18] sm:$0xff] %v234
    %255 = vst [vmem:[#allocation7 + $0x20] sm:$0xff] %v236
    %256 = vst [vmem:[#allocation7 + $0x28] sm:$0xff] %v238
    %257 = vst [vmem:[#allocation7 + $0x30] sm:$0xff] %v240
    %258 = vst [vmem:[#allocation7 + $0x38] sm:$0xff] %v242
    %259 = vst [vmem:[#allocation7 + $0x40] sm:$0xff] %v244
    %260 = vst [vmem:[#allocation7 + $0x48] sm:$0xff] %v246
    %261 = vst [vmem:[#allocation7 + $0x50] sm:$0xff] %v248
    %262 = vst [vmem:[#allocation7 + $0x58] sm:$0xff] %v250
    // Predicated region
    $region22: #{tpu_custom_call.1} parent=1 // pred_check
      _
    $region23: #{tpu_custom_call.1} parent=1 // pred_check_branch
      %264 = sbr.rel (0) target = $region25
    $region24: #{tpu_custom_call.1} parent=1 // pred_region
      %s266 = ssub.s32 1536, 1536
      %267 = vsyncadd [#allocation4], %s266
      %s268 = sshll.u32 [#allocation7], 4
      %s269 = int_to_ptr.vmem [resolvable:$true] %s268
      %274 = dma.vmem_to_hbm [thread:$0]  %s269, 1536, %s3, [#allocation4], 128, 128, 8
    $region25: #{tpu_custom_call.1} parent=1 // pred_fallthru
      _
    // Predicated region
    $region26: #{tpu_custom_call.1} parent=1 // pred_check
      _
    $region27: #{tpu_custom_call.1} parent=1 // pred_check_branch
      %276 = sbr.rel (0) target = $region29
    $region28: #{tpu_custom_call.1} parent=1 // pred_region
      %277 = dma.done [#allocation4], 1536
    $region29: #{tpu_custom_call.1} parent=1 // pred_fallthru
      _
    %278 = vsyncpa [#allocation3], 1
    %279 = vsyncpa [#allocation6], 1
    %280 = vsyncpa [#allocation4], 1

</llo_original>
